<compile_context>
chip_gen: v7x
topology: tpu7x:2x2x1
jax: 0.10.0
libtpu: 0.0.40
codegen_flags: <defaults>
</compile_context>

<pallas_src>
import jax
import jax.numpy as jnp
from jax import lax
from jax.experimental import pallas as pl
from jax.experimental.pallas import tpu as pltpu


def _round_up(x, m):
    return (x + m - 1) // m * m


# ---------------------------------------------------------------------------
# Path A: VMEM-resident table, chunked one-hot MXU gather
# ---------------------------------------------------------------------------
def _make_resident_kernel(num_chunks, chunk, precision):
    def kernel(idx_ref, w_ref, o_ref):
        # idx_ref: (T, 1) int32 token ids for this token tile
        # w_ref:   (Vp, Dp) full (padded) embedding table, VMEM resident
        # o_ref:   (T, Dp) output tile
        T = o_ref.shape[0]
        ids = idx_ref[...]                                        # (T, 1)
        cols0 = lax.broadcasted_iota(jnp.int32, (T, chunk), 1)    # (T, CV)

        def chunk_select(start):
            # Exact row-select: exactly one 1.0 per output row across all chunks.
            onehot = (cols0 + start == ids).astype(w_ref.dtype)   # (T, CV)
            rows = w_ref[pl.ds(start, chunk), :]                  # (CV, Dp)
            return jnp.dot(onehot, rows, precision=precision,
                           preferred_element_type=o_ref.dtype)

        # Chunk 0 writes o_ref directly: no zero-init, no f32 scratch accumulator
        # (adding exact 0.0 contributions from other chunks is lossless).
        o_ref[...] = chunk_select(0)
        if num_chunks > 1:
            def body(c, carry):
                o_ref[...] += chunk_select(pl.multiple_of(c * chunk, chunk))
                return carry
            lax.fori_loop(1, num_chunks, body, 0)

    return kernel


# ---------------------------------------------------------------------------
# Path B: table stays in HBM, per-row DMA gather (double-buffered)
# ---------------------------------------------------------------------------
def _gather_kernel(idx_ref, w_hbm, o_ref, buf, sems):
    # idx_ref: (Np,) int32 ids in SMEM (scalar prefetch)
    # w_hbm:   (V, Dp) embedding table left in HBM (memory_space=pl.ANY)
    # o_ref:   (T, Dp) output tile (auto-pipelined VMEM block)
    # buf:     (2, T, Dp) VMEM double buffer of gathered rows
    # sems:    (2,) DMA semaphores, one per slot
    i = pl.program_id(0)
    n_tiles = pl.num_programs(0)
    T = o_ref.shape[0]

    def start_tile(tile, slot):
        base = tile * T
        # TODO(synk): for very large T, issue in bounded waves to keep the DMA
        # descriptor queue from stalling the scalar core.
        def issue(t, carry):
            row = idx_ref[base + t]
            pltpu.make_async_copy(w_hbm.at[row], buf.at[slot, t],
                                  sems.at[slot]).start()
            return carry
        lax.fori_loop(0, T, issue, 0)

    def wait_tile(slot):
        def drain(t, carry):
            pltpu.make_async_copy(w_hbm.at[0], buf.at[slot, 0],
                                  sems.at[slot]).wait()
            return carry
        lax.fori_loop(0, T, drain, 0)

    slot = i % 2

    @pl.when(i == 0)
    def _():
        start_tile(0, 0)            # prime slot 0 with this tile's rows

    @pl.when(i + 1 < n_tiles)
    def _():
        start_tile(i + 1, 1 - slot)  # prefetch next tile's rows into other slot

    wait_tile(slot)
    o_ref[...] = buf[slot]


# ---------------------------------------------------------------------------
# Wrapper
# ---------------------------------------------------------------------------
def embedding_forward(words, weight, *, token_tile=256, vocab_chunk=512,
                      path="auto"):
    """Pallas equivalent of `Embedding.forward(words)` (nn.Embedding lookup)."""
    B, S = words.shape
    V, D = weight.shape
    N = B * S
    if N == 0:
        return jnp.zeros((B, S, D), weight.dtype)
    itemsize = jnp.dtype(weight.dtype).itemsize

    # Generation-aware VMEM budget (v7x: 64 MiB/TC, v5e/v6e: 128 MiB).
    try:
        vmem_cap = int(getattr(pltpu.get_tpu_info(), "vmem_capacity_bytes",
                               64 * 1024 * 1024))
    except Exception:
        vmem_cap = 64 * 1024 * 1024
    vmem_ceiling = (3 * vmem_cap) // 4   # leave 25% headroom for compiler scratch

    # PyTorch raises on out-of-range ids; here we clamp so we never index past V.
    idx = jnp.clip(words.reshape(-1).astype(jnp.int32), 0, V - 1)

    # Token tile: large enough to amortize ~0.35us per grid step, multiple of 16.
    T = _round_up(min(int(token_tile), _round_up(N, 16)), 16)
    Np = _round_up(N, T)
    if Np != N:
        idx = jnp.pad(idx, (0, Np - N))
    num_token_tiles = Np // T

    # Lane-dense embedding dim.
    Dp = _round_up(D, 128)

    # Resident-path vocab chunking: chunk is a multiple of 256 (full MXU K dim).
    CV = _round_up(min(int(vocab_chunk), _round_up(V, 256)), 256)
    Vp = _round_up(V, CV)
    num_chunks = Vp // CV

    # Honest VMEM estimates (including in-kernel one-hot temporaries + slack).
    resident_vmem = (2 * Vp * Dp * itemsize      # table block (double-buffered)
                     + 2 * T * Dp * itemsize     # output block buffers
                     + 2 * T * 4                 # id block buffers
                     + 3 * T * CV * 4            # iota / compare / one-hot temps
                     + T * Dp * 4                # matmul result temp
                     + 2 * (1 << 20))            # slack
    gather_vmem = (2 * T * Dp * itemsize         # (2, T, Dp) row buffer
                   + 2 * T * Dp * itemsize       # output block buffers
                   + 2 * (1 << 20))

    if path == "resident":
        use_resident = True
    elif path == "gather":
        use_resident = False
    else:
        use_resident = resident_vmem <= vmem_ceiling
    # Integer / quantized tables: one-hot MXU is not a faithful gather (and v7x
    # MXU has no integer mode) -> always take the DMA gather path.
    if not jnp.issubdtype(weight.dtype, jnp.floating):
        use_resident = False

    if use_resident:
        w = weight
        if Vp != V or Dp != D:
            w = jnp.pad(w, ((0, Vp - V), (0, Dp - D)))
        # f32 tables: HIGHEST keeps the MXU row-select numerically exact.
        precision = (lax.Precision.HIGHEST if w.dtype == jnp.float32
                     else lax.Precision.DEFAULT)
        vmem_limit = int(min(max(resident_vmem, 32 * (1 << 20)), vmem_ceiling))
        # NOTE: pipeline_mode=pl.Buffered(1) on the table spec would halve its
        # VMEM (constant block index, fetched once); kept default buffering for
        # portability and accounted for 2x in the budget instead.
        out_padded = pl.pallas_call(
            _make_resident_kernel(num_chunks, CV, precision),
            out_shape=jax.ShapeDtypeStruct((Np, Dp), weight.dtype),
            grid_spec=pltpu.PrefetchScalarGridSpec(
                num_scalar_prefetch=0,
                grid=(num_token_tiles,),
                in_specs=[
                    pl.BlockSpec((T, 1), lambda i: (i, 0)),      # token ids
                    pl.BlockSpec((Vp, Dp), lambda i: (0, 0)),    # resident table
                ],
                out_specs=pl.BlockSpec((T, Dp), lambda i: (i, 0)),
            ),
            compiler_params=pltpu.CompilerParams(
                dimension_semantics=("parallel",),
                vmem_limit_bytes=vmem_limit,
            ),
        )(idx.reshape(Np, 1), w)
    else:
        w = weight if Dp == D else jnp.pad(weight, ((0, 0), (0, Dp - D)))
        vmem_limit = int(min(max(gather_vmem, 32 * (1 << 20)), vmem_ceiling))
        out_padded = pl.pallas_call(
            _gather_kernel,
            out_shape=jax.ShapeDtypeStruct((Np, Dp), weight.dtype),
            grid_spec=pltpu.PrefetchScalarGridSpec(
                num_scalar_prefetch=1,                           # ids -> SMEM
                grid=(num_token_tiles,),
                in_specs=[pl.BlockSpec(memory_space=pl.ANY)],    # table in HBM
                out_specs=pl.BlockSpec((T, Dp), lambda i, idx_ref: (i, 0)),
                scratch_shapes=[
                    pltpu.VMEM((2, T, Dp), weight.dtype),        # row double buffer
                    pltpu.SemaphoreType.DMA((2,)),               # one sem per slot
                ],
            ),
            compiler_params=pltpu.CompilerParams(
                # "arbitrary": tile i+1's row DMAs are issued while tile i is
                # in flight, which assumes sequential grid execution on one TC.
                dimension_semantics=("arbitrary",),
                vmem_limit_bytes=vmem_limit,
            ),
        )(idx, w)

    out = out_padded
    if Np != N or Dp != D:
        out = out[:N, :D]
    return out.reshape(B, S, D)


if __name__ == "__main__":
    vocab_size = 64
    embed_dim = 128
    batch, seq = 2, 8

    key = jax.random.PRNGKey(0)
    k_w, k_ids = jax.random.split(key)

    # init_weights(): uniform_(-0.1, 0.1)
    weight = jax.random.uniform(
        k_w, (vocab_size, embed_dim), dtype=jnp.float32,
        minval=-0.1, maxval=0.1)

    words = jax.random.randint(
        k_ids, (batch, seq), minval=0, maxval=vocab_size, dtype=jnp.int32)

    ref = weight[words]

    # Resident (one-hot MXU) path.
    out_res = jax.block_until_ready(
        embedding_forward(words, weight, path="resident"))
    assert out_res.shape == (batch, seq, embed_dim)
    assert jnp.allclose(out_res, ref, atol=1e-6), "resident path mismatch"

    # DMA row-gather path (the large-vocab path), forced at small scale.
    out_gat = jax.block_until_ready(
        embedding_forward(words, weight, path="gather"))
    assert out_gat.shape == (batch, seq, embed_dim)
    assert jnp.allclose(out_gat, ref, atol=0.0), "gather path mismatch"

    # Auto path selection.
    out_auto = jax.block_until_ready(embedding_forward(words, weight))
    assert jnp.allclose(out_auto, ref, atol=1e-6), "auto path mismatch"

    print("KERNEL_OK")
</pallas_src>

<mosaic_0001>
module attributes {stable_mosaic.version = 11 : i64} {
  func.func @kernel(%arg0: i32, %arg1: memref<16x1xi32, #tpu.memory_space<vmem>>, %arg2: memref<256x128xf32, #tpu.memory_space<vmem>>, %arg3: memref<16x128xf32, #tpu.memory_space<vmem>>) attributes {dimension_semantics = [#tpu.dimension_semantics<parallel>], iteration_bounds = array<i64: 1>, scalar_prefetch = 0 : i64, scratch_operands = 0 : i64, tpu.core_type = #tpu.core_type<tc>, window_params = [{transform_indices = @transform_0, window_bounds = array<i64: 16, 1>}, {pipeline_mode = #tpu.pipeline_mode<synchronous>, transform_indices = @transform_1, window_bounds = array<i64: 256, 128>}, {transform_indices = @transform_2, window_bounds = array<i64: 16, 128>}]} {
    %c0 = arith.constant 0 : index
    %c0_0 = arith.constant 0 : index
    %0 = vector.load %arg1[%c0, %c0_0] : memref<16x1xi32, #tpu.memory_space<vmem>>, vector<16x1xi32>
    %1 = tpu.iota {dimensions = array<i32: 1>} : vector<16x256xi32>
    %c0_i32 = arith.constant 0 : i32
    %2 = vector.broadcast %c0_i32 : i32 to vector<16x256xi32>
    %3 = arith.addi %1, %2 : vector<16x256xi32>
    %4 = vector.broadcast %0 : vector<16x1xi32> to vector<16x256xi32>
    %5 = arith.cmpi eq, %3, %4 : vector<16x256xi32>
    %6 = arith.extui %5 : vector<16x256xi1> to vector<16x256xi32>
    %7 = arith.sitofp %6 : vector<16x256xi32> to vector<16x256xf32>
    %c0_1 = arith.constant 0 : index
    %c0_2 = arith.constant 0 : index
    %8 = vector.load %arg2[%c0_1, %c0_2] : memref<256x128xf32, #tpu.memory_space<vmem>>, vector<256x128xf32>
    %cst = arith.constant dense<0.000000e+00> : vector<16x128xf32>
    %9 = tpu.matmul %7, %8, %cst {dimension_numbers = #tpu.dot_dimension_numbers<[1], [0], [0], [1], [0, 0, 1, 1], [], []>, precision = #tpu.contract_precision<fp32>} : vector<16x256xf32>, vector<256x128xf32>, vector<16x128xf32> -> vector<16x128xf32>
    %c0_3 = arith.constant 0 : index
    %c0_4 = arith.constant 0 : index
    %10 = vector.load %arg3[%c0_3, %c0_4] : memref<16x128xf32, #tpu.memory_space<vmem>>, vector<16x128xf32>
    tpu.vector_store %arg3[%c0_3, %c0_4], %9 {strides = array<i32>} : memref<16x128xf32, #tpu.memory_space<vmem>>, vector<16x128xf32>,
    return
  }
  func.func @transform_0(%arg0: i32) -> (i32, i32) {
    %c0_i32 = arith.constant 0 : i32
    %c0_i32_0 = arith.constant 0 : i32
    return %arg0, %c0_i32 : i32, i32
  }
  func.func @transform_1(%arg0: i32) -> (i32, i32) {
    %c0_i32 = arith.constant 0 : i32
    %c0_i32_0 = arith.constant 0 : i32
    %c0_i32_1 = arith.constant 0 : i32
    return %c0_i32, %c0_i32_0 : i32, i32
  }
  func.func @transform_2(%arg0: i32) -> (i32, i32) {
    %c0_i32 = arith.constant 0 : i32
    %c0_i32_0 = arith.constant 0 : i32
    return %arg0, %c0_i32 : i32, i32
  }
}

</mosaic_0001>

<llo_original>
// kernel: tpu_custom_call.1
$region0: #{tpu_custom_call.1}
  #allocation0 [shape = 'u32[]', space=smem, size = 0x4, offset = 0x4, fixed_abs, tag = 'smem constant byte address 0x4 - core index']
  #allocation1 [shape = 'u32[144,128]{1,0:T(1,128)}', space=vmem, size = 0x12000, scoped, tag = 'internal scratch']
  %s0 = inlined_call_operand.vmem [shape: s32[16,1], index: 0, kind: input, shape index: {}]
  %s1 = inlined_call_operand.hbm [shape: f32[256,128], index: 1, kind: input, shape index: {}]
  %s2 = inlined_call_operand.hbm [shape: f32[16,128], index: 2, kind: output, shape index: {}]
  %s3 = sld [smem:[#allocation0]]
  $region22: #{tpu_custom_call.1} parent=0
    _
  %s5 = ssub.s32 1, %s3
  %s6 = scalar_select 0, %s5, %s3
  $region1: #{tpu_custom_call.1} parent=0
    #allocation2 [shape = 'u8[131072]{0}', space=vmem, size = 0x20000, scoped, tag = 'input window, operand 1, single buffered']
    #allocation3 [shape = 's32[1]{0}', space=sflag, size = 0x4, scoped, tag = 'scoped memory for tpu_custom_call.1']
    #allocation4 [shape = 's32[1]{0}', space=sflag, size = 0x4, scoped, tag = 'scoped memory for tpu_custom_call.1']
    #allocation5 [shape = 'u8[8192]{0}', space=vmem, size = 0x2000, scoped, tag = 'output window, operand 0, single buffered']
    %7 = vsyncpa [#allocation3], 0
    %8 = vsyncpa [#allocation4], 0
    // Predicated region
    $region2: #{tpu_custom_call.1} parent=1 // pred_check
      _
    $region3: #{tpu_custom_call.1} parent=1 // pred_check_branch
      %10 = sbr.rel (0) target = $region5
    $region4: #{tpu_custom_call.1} parent=1 // pred_region
      _
    $region5: #{tpu_custom_call.1} parent=1 // pred_fallthru
      _
    // Predicated region
    $region6: #{tpu_custom_call.1} parent=1 // pred_check
      _
    $region7: #{tpu_custom_call.1} parent=1 // pred_check_branch
      %12 = sbr.rel (0) target = $region9
    $region8: #{tpu_custom_call.1} parent=1 // pred_region
      %s14 = ssub.s32 4096, 4096
      %15 = vsyncadd [#allocation3], %s14
      %s16 = sshll.u32 [#allocation2], 4
      %s17 = int_to_ptr.vmem [resolvable:$true] %s16
      %22 = dma.hbm_to_vmem [thread:$0]  %s1, 4096, %s17, [#allocation3], 128, 128, 8
    $region9: #{tpu_custom_call.1} parent=1 // pred_fallthru
      _
    // Predicated region
    $region10: #{tpu_custom_call.1} parent=1 // pred_check
      _
    $region11: #{tpu_custom_call.1} parent=1 // pred_check_branch
      %24 = sbr.rel (0) target = $region13
    $region12: #{tpu_custom_call.1} parent=1 // pred_region
      %25 = dma.done [#allocation3], 4096
    $region13: #{tpu_custom_call.1} parent=1 // pred_fallthru
      _
    %v26 = vld [vmem:[%s0] sm:$0xff]
    %v27 = vld [vmem:[%s0 + $0x8] sm:$0xff]
    %v28 = vlaneseq
    %v29 = vand.u32 %v28, 127
    %v30 = vadd.s32 %v29, 128
    %31 = vset.pattern.permute.xlu0 0
    %32 = vperm.xlu0 %31, %v26
    %v33 = vpop.permute.xlu0 %32
    %34 = vset.pattern.permute.xlu0 0
    %35 = vperm.xlu0 %34, %v27
    %v36 = vpop.permute.xlu0 %35
    %vm37 = vcmp.eq.s32.totalorder %v29, %v33
    %vm38 = vcmp.eq.s32.totalorder %v30, %v33
    %vm39 = vcmp.eq.s32.totalorder %v29, %v36
    %vm40 = vcmp.eq.s32.totalorder %v30, %v36
    %v41 = vsel %vm37, 1, 0
    %v42 = vsel %vm38, 1, 0
    %v43 = vsel %vm39, 1, 0
    %v44 = vsel %vm40, 1, 0
    %v45 = vcvt.s32.f32 %v41
    %v46 = vcvt.s32.f32 %v42
    %v47 = vcvt.s32.f32 %v43
    %v48 = vcvt.s32.f32 %v44
    %v49 = vld [vmem:[#allocation2] sm:$0xff]
    %v50 = vld [vmem:[#allocation2 + $0x8] sm:$0xff]
    %v51 = vld [vmem:[#allocation2 + $0x10] sm:$0xff]
    %v52 = vld [vmem:[#allocation2 + $0x18] sm:$0xff]
    %v53 = vld [vmem:[#allocation2 + $0x20] sm:$0xff]
    %v54 = vld [vmem:[#allocation2 + $0x28] sm:$0xff]
    %v55 = vld [vmem:[#allocation2 + $0x30] sm:$0xff]
    %v56 = vld [vmem:[#allocation2 + $0x38] sm:$0xff]
    %v57 = vld [vmem:[#allocation2 + $0x40] sm:$0xff]
    %v58 = vld [vmem:[#allocation2 + $0x48] sm:$0xff]
    %v59 = vld [vmem:[#allocation2 + $0x50] sm:$0xff]
    %v60 = vld [vmem:[#allocation2 + $0x58] sm:$0xff]
    %v61 = vld [vmem:[#allocation2 + $0x60] sm:$0xff]
    %v62 = vld [vmem:[#allocation2 + $0x68] sm:$0xff]
    %v63 = vld [vmem:[#allocation2 + $0x70] sm:$0xff]
    %v64 = vld [vmem:[#allocation2 + $0x78] sm:$0xff]
    %v65 = vld [vmem:[#allocation2 + $0x80] sm:$0xff]
    %v66 = vld [vmem:[#allocation2 + $0x88] sm:$0xff]
    %v67 = vld [vmem:[#allocation2 + $0x90] sm:$0xff]
    %v68 = vld [vmem:[#allocation2 + $0x98] sm:$0xff]
    %v69 = vld [vmem:[#allocation2 + $0xa0] sm:$0xff]
    %v70 = vld [vmem:[#allocation2 + $0xa8] sm:$0xff]
    %v71 = vld [vmem:[#allocation2 + $0xb0] sm:$0xff]
    %v72 = vld [vmem:[#allocation2 + $0xb8] sm:$0xff]
    %v73 = vld [vmem:[#allocation2 + $0xc0] sm:$0xff]
    %v74 = vld [vmem:[#allocation2 + $0xc8] sm:$0xff]
    %v75 = vld [vmem:[#allocation2 + $0xd0] sm:$0xff]
    %v76 = vld [vmem:[#allocation2 + $0xd8] sm:$0xff]
    %v77 = vld [vmem:[#allocation2 + $0xe0] sm:$0xff]
    %v78 = vld [vmem:[#allocation2 + $0xe8] sm:$0xff]
    %v79 = vld [vmem:[#allocation2 + $0xf0] sm:$0xff]
    %v80 = vld [vmem:[#allocation2 + $0xf8] sm:$0xff]
    %81 = vmatprep.subr.mxu0 0.0
    %v82 = vand.u32 %v49, 4294901760
    %83 = vmatpush1.msra.mxu0 %v82
    %84 = vmatprep.subr.mxu0 0.0
    %v85 = vand.u32 %v50, 4294901760
    %86 = vmatpush1.msra.mxu0 %v85
    %87 = vmatprep.subr.mxu0 0.0
    %v88 = vand.u32 %v51, 4294901760
    %89 = vmatpush1.msra.mxu0 %v88
    %90 = vmatprep.subr.mxu0 0.0
    %v91 = vand.u32 %v52, 4294901760
    %92 = vmatpush1.msra.mxu0 %v91
    %93 = vmatprep.subr.mxu0 0.0
    %v94 = vand.u32 %v53, 4294901760
    %95 = vmatpush1.msra.mxu0 %v94
    %96 = vmatprep.subr.mxu0 0.0
    %v97 = vand.u32 %v54, 4294901760
    %98 = vmatpush1.msra.mxu0 %v97
    %99 = vmatprep.subr.mxu0 0.0
    %v100 = vand.u32 %v55, 4294901760
    %101 = vmatpush1.msra.mxu0 %v100
    %102 = vmatprep.subr.mxu0 0.0
    %v103 = vand.u32 %v56, 4294901760
    %104 = vmatpush1.msra.mxu0 %v103
    %105 = vmatprep.subr.mxu0 0.0
    %v106 = vand.u32 %v57, 4294901760
    %107 = vmatpush1.msra.mxu0 %v106
    %108 = vmatprep.subr.mxu0 0.0
    %v109 = vand.u32 %v58, 4294901760
    %110 = vmatpush1.msra.mxu0 %v109
    %111 = vmatprep.subr.mxu0 0.0
    %v112 = vand.u32 %v59, 4294901760
    %113 = vmatpush1.msra.mxu0 %v112
    %114 = vmatprep.subr.mxu0 0.0
    %v115 = vand.u32 %v60, 4294901760
    %116 = vmatpush1.msra.mxu0 %v115
    %117 = vmatprep.subr.mxu0 0.0
    %v118 = vand.u32 %v61, 4294901760
    %119 = vmatpush1.msra.mxu0 %v118
    %120 = vmatprep.subr.mxu0 0.0
    %v121 = vand.u32 %v62, 4294901760
    %122 = vmatpush1.msra.mxu0 %v121
    %123 = vmatprep.subr.mxu0 0.0
    %v124 = vand.u32 %v63, 4294901760
    %125 = vmatpush1.msra.mxu0 %v124
    %126 = vmatprep.subr.mxu0 0.0
    %v127 = vand.u32 %v64, 4294901760
    %128 = vmatpush1.msra.mxu0 %v127
    %129 = vmatprep.subr.mxu0 0.0
    %v130 = vand.u32 %v65, 4294901760
    %131 = vmatpush1.msra.mxu0 %v130
    %132 = vmatprep.subr.mxu0 0.0
    %v133 = vand.u32 %v66, 4294901760
    %134 = vmatpush1.msra.mxu0 %v133
    %135 = vmatprep.subr.mxu0 0.0
    %v136 = vand.u32 %v67, 4294901760
    %137 = vmatpush1.msra.mxu0 %v136
    %138 = vmatprep.subr.mxu0 0.0
    %v139 = vand.u32 %v68, 4294901760
    %140 = vmatpush1.msra.mxu0 %v139
    %141 = vmatprep.subr.mxu0 0.0
    %v142 = vand.u32 %v69, 4294901760
    %143 = vmatpush1.msra.mxu0 %v142
    %144 = vmatprep.subr.mxu0 0.0
    %v145 = vand.u32 %v70, 4294901760
    %146 = vmatpush1.msra.mxu0 %v145
    %147 = vmatprep.subr.mxu0 0.0
    %v148 = vand.u32 %v71, 4294901760
    %149 = vmatpush1.msra.mxu0 %v148
    %150 = vmatprep.subr.mxu0 0.0
    %v151 = vand.u32 %v72, 4294901760
    %152 = vmatpush1.msra.mxu0 %v151
    %153 = vmatprep.subr.mxu0 0.0
    %v154 = vand.u32 %v73, 4294901760
    %155 = vmatpush1.msra.mxu0 %v154
    %156 = vmatprep.subr.mxu0 0.0
    %v157 = vand.u32 %v74, 4294901760
    %158 = vmatpush1.msra.mxu0 %v157
    %159 = vmatprep.subr.mxu0 0.0
    %v160 = vand.u32 %v75, 4294901760
    %161 = vmatpush1.msra.mxu0 %v160
    %162 = vmatprep.subr.mxu0 0.0
    %v163 = vand.u32 %v76, 4294901760
    %164 = vmatpush1.msra.mxu0 %v163
    %165 = vmatprep.subr.mxu0 0.0
    %v166 = vand.u32 %v77, 4294901760
    %167 = vmatpush1.msra.mxu0 %v166
    %168 = vmatprep.subr.mxu0 0.0
    %v169 = vand.u32 %v78, 4294901760
    %170 = vmatpush1.msra.mxu0 %v169
    %171 = vmatprep.subr.mxu0 0.0
    %v172 = vand.u32 %v79, 4294901760
    %173 = vmatpush1.msra.mxu0 %v172
    %174 = vmatprep.subr.mxu0 0.0
    %v175 = vand.u32 %v80, 4294901760
    %176 = vmatpush1.msra.mxu0 %v175
    %v177 = vand.u32 %v46, 4294901760
    %v178 = vsub.f32 %v46, %v177
    %v179 = vand.u32 %v178, 4294901760
    %v180 = vsub.f32 %v178, %v179
    %v181 = vand.u32 %v180, 4294901760
    %182 = vmatprep.mubr.f32.mxu0 %v181
    %v183 = vand.u32 %v45, 4294901760
    %v184 = vsub.f32 %v45, %v183
    %v185 = vand.u32 %v184, 4294901760
    %v186 = vsub.f32 %v184, %v185
    %v187 = vand.u32 %v186, 4294901760
    %188 = vmatmul.mubr.f32.gmra.mrb[0].mxu0 %v187
    %v189 = vpop.f32.mrb[0].mxu0
    %v190 = vadd.f32 0.0, %v189
    %v191 = vpop.f32.mrb[0].mxu0
    %v192 = vand.u32 %v48, 4294901760
    %v193 = vsub.f32 %v48, %v192
    %v194 = vand.u32 %v193, 4294901760
    %v195 = vsub.f32 %v193, %v194
    %v196 = vand.u32 %v195, 4294901760
    %197 = vmatprep.mubr.f32.mxu0 %v196
    %v198 = vand.u32 %v47, 4294901760
    %v199 = vsub.f32 %v47, %v198
    %v200 = vand.u32 %v199, 4294901760
    %v201 = vsub.f32 %v199, %v200
    %v202 = vand.u32 %v201, 4294901760
    %203 = vmatmul.mubr.f32.gmra.mrb[0].mxu0 %v202
    %v204 = vpop.f32.mrb[0].mxu0
    %v205 = vadd.f32 0.0, %v204
    %v206 = vpop.f32.mrb[0].mxu0
    %207 = vdwg.mxu0
    %208 = vmatprep.subr.mxu0 0.0
    %v209 = vand.u32 %v49, 4294901760
    %v210 = vsub.f32 %v49, %v209
    %v211 = vand.u32 %v210, 4294901760
    %v212 = vsub.f32 %v210, %v211
    %v213 = vand.u32 %v212, 4294901760
    %214 = vmatpush1.msra.mxu0 %v213
    %215 = vmatprep.subr.mxu0 0.0
    %v216 = vand.u32 %v50, 4294901760
    %v217 = vsub.f32 %v50, %v216
    %v218 = vand.u32 %v217, 4294901760
    %v219 = vsub.f32 %v217, %v218
    %v220 = vand.u32 %v219, 4294901760
    %221 = vmatpush1.msra.mxu0 %v220
    %222 = vmatprep.subr.mxu0 0.0
    %v223 = vand.u32 %v51, 4294901760
    %v224 = vsub.f32 %v51, %v223
    %v225 = vand.u32 %v224, 4294901760
    %v226 = vsub.f32 %v224, %v225
    %v227 = vand.u32 %v226, 4294901760
    %228 = vmatpush1.msra.mxu0 %v227
    %229 = vmatprep.subr.mxu0 0.0
    %v230 = vand.u32 %v52, 4294901760
    %v231 = vsub.f32 %v52, %v230
    %v232 = vand.u32 %v231, 4294901760
    %v233 = vsub.f32 %v231, %v232
    %v234 = vand.u32 %v233, 4294901760
    %235 = vmatpush1.msra.mxu0 %v234
    %236 = vmatprep.subr.mxu0 0.0
    %v237 = vand.u32 %v53, 4294901760
    %v238 = vsub.f32 %v53, %v237
    %v239 = vand.u32 %v238, 4294901760
    %v240 = vsub.f32 %v238, %v239
    %v241 = vand.u32 %v240, 4294901760
    %242 = vmatpush1.msra.mxu0 %v241
    %243 = vmatprep.subr.mxu0 0.0
    %v244 = vand.u32 %v54, 4294901760
    %v245 = vsub.f32 %v54, %v244
    %v246 = vand.u32 %v245, 4294901760
    %v247 = vsub.f32 %v245, %v246
    %v248 = vand.u32 %v247, 4294901760
    %249 = vmatpush1.msra.mxu0 %v248
    %250 = vmatprep.subr.mxu0 0.0
    %v251 = vand.u32 %v55, 4294901760
    %v252 = vsub.f32 %v55, %v251
    %v253 = vand.u32 %v252, 4294901760
    %v254 = vsub.f32 %v252, %v253
    %v255 = vand.u32 %v254, 4294901760
    %256 = vmatpush1.msra.mxu0 %v255
    %257 = vmatprep.subr.mxu0 0.0
    %v258 = vand.u32 %v56, 4294901760
    %v259 = vsub.f32 %v56, %v258
    %v260 = vand.u32 %v259, 4294901760
    %v261 = vsub.f32 %v259, %v260
    %v262 = vand.u32 %v261, 4294901760
    %263 = vmatpush1.msra.mxu0 %v262
    %264 = vmatprep.subr.mxu0 0.0
    %v265 = vand.u32 %v57, 4294901760
    %v266 = vsub.f32 %v57, %v265
    %v267 = vand.u32 %v266, 4294901760
    %v268 = vsub.f32 %v266, %v267
    %v269 = vand.u32 %v268, 4294901760
    %270 = vmatpush1.msra.mxu0 %v269
    %271 = vmatprep.subr.mxu0 0.0
    %v272 = vand.u32 %v58, 4294901760
    %v273 = vsub.f32 %v58, %v272
    %v274 = vand.u32 %v273, 4294901760
    %v275 = vsub.f32 %v273, %v274
    %v276 = vand.u32 %v275, 4294901760
    %277 = vmatpush1.msra.mxu0 %v276
    %278 = vmatprep.subr.mxu0 0.0
    %v279 = vand.u32 %v59, 4294901760
    %v280 = vsub.f32 %v59, %v279
    %v281 = vand.u32 %v280, 4294901760
    %v282 = vsub.f32 %v280, %v281
    %v283 = vand.u32 %v282, 4294901760
    %284 = vmatpush1.msra.mxu0 %v283
    %285 = vmatprep.subr.mxu0 0.0
    %v286 = vand.u32 %v60, 4294901760
    %v287 = vsub.f32 %v60, %v286
    %v288 = vand.u32 %v287, 4294901760
    %v289 = vsub.f32 %v287, %v288
    %v290 = vand.u32 %v289, 4294901760
    %291 = vmatpush1.msra.mxu0 %v290
    %292 = vmatprep.subr.mxu0 0.0
    %v293 = vand.u32 %v61, 4294901760
    %v294 = vsub.f32 %v61, %v293
    %v295 = vand.u32 %v294, 4294901760
    %v296 = vsub.f32 %v294, %v295
    %v297 = vand.u32 %v296, 4294901760
    %298 = vmatpush1.msra.mxu0 %v297
    %299 = vmatprep.subr.mxu0 0.0
    %v300 = vand.u32 %v62, 4294901760
    %v301 = vsub.f32 %v62, %v300
    %v302 = vand.u32 %v301, 4294901760
    %v303 = vsub.f32 %v301, %v302
    %v304 = vand.u32 %v303, 4294901760
    %305 = vmatpush1.msra.mxu0 %v304
    %306 = vmatprep.subr.mxu0 0.0
    %v307 = vand.u32 %v63, 4294901760
    %v308 = vsub.f32 %v63, %v307
    %v309 = vand.u32 %v308, 4294901760
    %v310 = vsub.f32 %v308, %v309
    %v311 = vand.u32 %v310, 4294901760
    %312 = vmatpush1.msra.mxu0 %v311
    %313 = vmatprep.subr.mxu0 0.0
    %v314 = vand.u32 %v64, 4294901760
    %v315 = vsub.f32 %v64, %v314
    %v316 = vand.u32 %v315, 4294901760
    %v317 = vsub.f32 %v315, %v316
    %v318 = vand.u32 %v317, 4294901760
    %319 = vmatpush1.msra.mxu0 %v318
    %320 = vmatprep.subr.mxu0 0.0
    %v321 = vand.u32 %v65, 4294901760
    %v322 = vsub.f32 %v65, %v321
    %v323 = vand.u32 %v322, 4294901760
    %v324 = vsub.f32 %v322, %v323
    %v325 = vand.u32 %v324, 4294901760
    %326 = vmatpush1.msra.mxu0 %v325
    %327 = vmatprep.subr.mxu0 0.0
    %v328 = vand.u32 %v66, 4294901760
    %v329 = vsub.f32 %v66, %v328
    %v330 = vand.u32 %v329, 4294901760
    %v331 = vsub.f32 %v329, %v330
    %v332 = vand.u32 %v331, 4294901760
    %333 = vmatpush1.msra.mxu0 %v332
    %334 = vmatprep.subr.mxu0 0.0
    %v335 = vand.u32 %v67, 4294901760
    %v336 = vsub.f32 %v67, %v335
    %v337 = vand.u32 %v336, 4294901760
    %v338 = vsub.f32 %v336, %v337
    %v339 = vand.u32 %v338, 4294901760
    %340 = vmatpush1.msra.mxu0 %v339
    %341 = vmatprep.subr.mxu0 0.0
    %v342 = vand.u32 %v68, 4294901760
    %v343 = vsub.f32 %v68, %v342
    %v344 = vand.u32 %v343, 4294901760
    %v345 = vsub.f32 %v343, %v344
    %v346 = vand.u32 %v345, 4294901760
    %347 = vmatpush1.msra.mxu0 %v346
    %348 = vmatprep.subr.mxu0 0.0
    %v349 = vand.u32 %v69, 4294901760
    %v350 = vsub.f32 %v69, %v349
    %v351 = vand.u32 %v350, 4294901760
    %v352 = vsub.f32 %v350, %v351
    %v353 = vand.u32 %v352, 4294901760
    %354 = vmatpush1.msra.mxu0 %v353
    %355 = vmatprep.subr.mxu0 0.0
    %v356 = vand.u32 %v70, 4294901760
    %v357 = vsub.f32 %v70, %v356
    %v358 = vand.u32 %v357, 4294901760
    %v359 = vsub.f32 %v357, %v358
    %v360 = vand.u32 %v359, 4294901760
    %361 = vmatpush1.msra.mxu0 %v360
    %362 = vmatprep.subr.mxu0 0.0
    %v363 = vand.u32 %v71, 4294901760
    %v364 = vsub.f32 %v71, %v363
    %v365 = vand.u32 %v364, 4294901760
    %v366 = vsub.f32 %v364, %v365
    %v367 = vand.u32 %v366, 4294901760
    %368 = vmatpush1.msra.mxu0 %v367
    %369 = vmatprep.subr.mxu0 0.0
    %v370 = vand.u32 %v72, 4294901760
    %v371 = vsub.f32 %v72, %v370
    %v372 = vand.u32 %v371, 4294901760
    %v373 = vsub.f32 %v371, %v372
    %v374 = vand.u32 %v373, 4294901760
    %375 = vmatpush1.msra.mxu0 %v374
    %376 = vmatprep.subr.mxu0 0.0
    %v377 = vand.u32 %v73, 4294901760
    %v378 = vsub.f32 %v73, %v377
    %v379 = vand.u32 %v378, 4294901760
    %v380 = vsub.f32 %v378, %v379
    %v381 = vand.u32 %v380, 4294901760
    %382 = vmatpush1.msra.mxu0 %v381
    %383 = vmatprep.subr.mxu0 0.0
    %v384 = vand.u32 %v74, 4294901760
    %v385 = vsub.f32 %v74, %v384
    %v386 = vand.u32 %v385, 4294901760
    %v387 = vsub.f32 %v385, %v386
    %v388 = vand.u32 %v387, 4294901760
    %389 = vmatpush1.msra.mxu0 %v388
    %390 = vmatprep.subr.mxu0 0.0
    %v391 = vand.u32 %v75, 4294901760
    %v392 = vsub.f32 %v75, %v391
    %v393 = vand.u32 %v392, 4294901760
    %v394 = vsub.f32 %v392, %v393
    %v395 = vand.u32 %v394, 4294901760
    %396 = vmatpush1.msra.mxu0 %v395
    %397 = vmatprep.subr.mxu0 0.0
    %v398 = vand.u32 %v76, 4294901760
    %v399 = vsub.f32 %v76, %v398
    %v400 = vand.u32 %v399, 4294901760
    %v401 = vsub.f32 %v399, %v400
    %v402 = vand.u32 %v401, 4294901760
    %403 = vmatpush1.msra.mxu0 %v402
    %404 = vmatprep.subr.mxu0 0.0
    %v405 = vand.u32 %v77, 4294901760
    %v406 = vsub.f32 %v77, %v405
    %v407 = vand.u32 %v406, 4294901760
    %v408 = vsub.f32 %v406, %v407
    %v409 = vand.u32 %v408, 4294901760
    %410 = vmatpush1.msra.mxu0 %v409
    %411 = vmatprep.subr.mxu0 0.0
    %v412 = vand.u32 %v78, 4294901760
    %v413 = vsub.f32 %v78, %v412
    %v414 = vand.u32 %v413, 4294901760
    %v415 = vsub.f32 %v413, %v414
    %v416 = vand.u32 %v415, 4294901760
    %417 = vmatpush1.msra.mxu0 %v416
    %418 = vmatprep.subr.mxu0 0.0
    %v419 = vand.u32 %v79, 4294901760
    %v420 = vsub.f32 %v79, %v419
    %v421 = vand.u32 %v420, 4294901760
    %v422 = vsub.f32 %v420, %v421
    %v423 = vand.u32 %v422, 4294901760
    %424 = vmatpush1.msra.mxu0 %v423
    %425 = vmatprep.subr.mxu0 0.0
    %v426 = vand.u32 %v80, 4294901760
    %v427 = vsub.f32 %v80, %v426
    %v428 = vand.u32 %v427, 4294901760
    %v429 = vsub.f32 %v427, %v428
    %v430 = vand.u32 %v429, 4294901760
    %431 = vmatpush1.msra.mxu0 %v430
    %v432 = vand.u32 %v46, 4294901760
    %433 = vmatprep.mubr.f32.mxu0 %v432
    %v434 = vand.u32 %v45, 4294901760
    %435 = vmatmul.mubr.f32.gmra.mrb[0].mxu0 %v434
    %v436 = vpop.f32.mrb[0].mxu0
    %v437 = vadd.f32 %v190, %v436
    %v438 = vpop.f32.mrb[0].mxu0
    %v439 = vand.u32 %v48, 4294901760
    %440 = vmatprep.mubr.f32.mxu0 %v439
    %v441 = vand.u32 %v47, 4294901760
    %442 = vmatmul.mubr.f32.gmra.mrb[0].mxu0 %v441
    %v443 = vpop.f32.mrb[0].mxu0
    %v444 = vadd.f32 %v205, %v443
    %v445 = vpop.f32.mrb[0].mxu0
    %446 = vdwg.mxu0
    %447 = vmatprep.subr.mxu0 0.0
    %v448 = vand.u32 %v49, 4294901760
    %v449 = vsub.f32 %v49, %v448
    %450 = vmatpush1.msra.mxu0 %v449
    %451 = vmatprep.subr.mxu0 0.0
    %v452 = vand.u32 %v50, 4294901760
    %v453 = vsub.f32 %v50, %v452
    %454 = vmatpush1.msra.mxu0 %v453
    %455 = vmatprep.subr.mxu0 0.0
    %v456 = vand.u32 %v51, 4294901760
    %v457 = vsub.f32 %v51, %v456
    %458 = vmatpush1.msra.mxu0 %v457
    %459 = vmatprep.subr.mxu0 0.0
    %v460 = vand.u32 %v52, 4294901760
    %v461 = vsub.f32 %v52, %v460
    %462 = vmatpush1.msra.mxu0 %v461
    %463 = vmatprep.subr.mxu0 0.0
    %v464 = vand.u32 %v53, 4294901760
    %v465 = vsub.f32 %v53, %v464
    %466 = vmatpush1.msra.mxu0 %v465
    %467 = vmatprep.subr.mxu0 0.0
    %v468 = vand.u32 %v54, 4294901760
    %v469 = vsub.f32 %v54, %v468
    %470 = vmatpush1.msra.mxu0 %v469
    %471 = vmatprep.subr.mxu0 0.0
    %v472 = vand.u32 %v55, 4294901760
    %v473 = vsub.f32 %v55, %v472
    %474 = vmatpush1.msra.mxu0 %v473
    %475 = vmatprep.subr.mxu0 0.0
    %v476 = vand.u32 %v56, 4294901760
    %v477 = vsub.f32 %v56, %v476
    %478 = vmatpush1.msra.mxu0 %v477
    %479 = vmatprep.subr.mxu0 0.0
    %v480 = vand.u32 %v57, 4294901760
    %v481 = vsub.f32 %v57, %v480
    %482 = vmatpush1.msra.mxu0 %v481
    %483 = vmatprep.subr.mxu0 0.0
    %v484 = vand.u32 %v58, 4294901760
    %v485 = vsub.f32 %v58, %v484
    %486 = vmatpush1.msra.mxu0 %v485
    %487 = vmatprep.subr.mxu0 0.0
    %v488 = vand.u32 %v59, 4294901760
    %v489 = vsub.f32 %v59, %v488
    %490 = vmatpush1.msra.mxu0 %v489
    %491 = vmatprep.subr.mxu0 0.0
    %v492 = vand.u32 %v60, 4294901760
    %v493 = vsub.f32 %v60, %v492
    %494 = vmatpush1.msra.mxu0 %v493
    %495 = vmatprep.subr.mxu0 0.0
    %v496 = vand.u32 %v61, 4294901760
    %v497 = vsub.f32 %v61, %v496
    %498 = vmatpush1.msra.mxu0 %v497
    %499 = vmatprep.subr.mxu0 0.0
    %v500 = vand.u32 %v62, 4294901760
    %v501 = vsub.f32 %v62, %v500
    %502 = vmatpush1.msra.mxu0 %v501
    %503 = vmatprep.subr.mxu0 0.0
    %v504 = vand.u32 %v63, 4294901760
    %v505 = vsub.f32 %v63, %v504
    %506 = vmatpush1.msra.mxu0 %v505
    %507 = vmatprep.subr.mxu0 0.0
    %v508 = vand.u32 %v64, 4294901760
    %v509 = vsub.f32 %v64, %v508
    %510 = vmatpush1.msra.mxu0 %v509
    %511 = vmatprep.subr.mxu0 0.0
    %v512 = vand.u32 %v65, 4294901760
    %v513 = vsub.f32 %v65, %v512
    %514 = vmatpush1.msra.mxu0 %v513
    %515 = vmatprep.subr.mxu0 0.0
    %v516 = vand.u32 %v66, 4294901760
    %v517 = vsub.f32 %v66, %v516
    %518 = vmatpush1.msra.mxu0 %v517
    %519 = vmatprep.subr.mxu0 0.0
    %v520 = vand.u32 %v67, 4294901760
    %v521 = vsub.f32 %v67, %v520
    %522 = vmatpush1.msra.mxu0 %v521
    %523 = vmatprep.subr.mxu0 0.0
    %v524 = vand.u32 %v68, 4294901760
    %v525 = vsub.f32 %v68, %v524
    %526 = vmatpush1.msra.mxu0 %v525
    %527 = vmatprep.subr.mxu0 0.0
    %v528 = vand.u32 %v69, 4294901760
    %v529 = vsub.f32 %v69, %v528
    %530 = vmatpush1.msra.mxu0 %v529
    %531 = vmatprep.subr.mxu0 0.0
    %v532 = vand.u32 %v70, 4294901760
    %v533 = vsub.f32 %v70, %v532
    %534 = vmatpush1.msra.mxu0 %v533
    %535 = vmatprep.subr.mxu0 0.0
    %v536 = vand.u32 %v71, 4294901760
    %v537 = vsub.f32 %v71, %v536
    %538 = vmatpush1.msra.mxu0 %v537
    %539 = vmatprep.subr.mxu0 0.0
    %v540 = vand.u32 %v72, 4294901760
    %v541 = vsub.f32 %v72, %v540
    %542 = vmatpush1.msra.mxu0 %v541
    %543 = vmatprep.subr.mxu0 0.0
    %v544 = vand.u32 %v73, 4294901760
    %v545 = vsub.f32 %v73, %v544
    %546 = vmatpush1.msra.mxu0 %v545
    %547 = vmatprep.subr.mxu0 0.0
    %v548 = vand.u32 %v74, 4294901760
    %v549 = vsub.f32 %v74, %v548
    %550 = vmatpush1.msra.mxu0 %v549
    %551 = vmatprep.subr.mxu0 0.0
    %v552 = vand.u32 %v75, 4294901760
    %v553 = vsub.f32 %v75, %v552
    %554 = vmatpush1.msra.mxu0 %v553
    %555 = vmatprep.subr.mxu0 0.0
    %v556 = vand.u32 %v76, 4294901760
    %v557 = vsub.f32 %v76, %v556
    %558 = vmatpush1.msra.mxu0 %v557
    %559 = vmatprep.subr.mxu0 0.0
    %v560 = vand.u32 %v77, 4294901760
    %v561 = vsub.f32 %v77, %v560
    %562 = vmatpush1.msra.mxu0 %v561
    %563 = vmatprep.subr.mxu0 0.0
    %v564 = vand.u32 %v78, 4294901760
    %v565 = vsub.f32 %v78, %v564
    %566 = vmatpush1.msra.mxu0 %v565
    %567 = vmatprep.subr.mxu0 0.0
    %v568 = vand.u32 %v79, 4294901760
    %v569 = vsub.f32 %v79, %v568
    %570 = vmatpush1.msra.mxu0 %v569
    %571 = vmatprep.subr.mxu0 0.0
    %v572 = vand.u32 %v80, 4294901760
    %v573 = vsub.f32 %v80, %v572
    %574 = vmatpush1.msra.mxu0 %v573
    %v575 = vand.u32 %v46, 4294901760
    %v576 = vsub.f32 %v46, %v575
    %577 = vmatprep.mubr.f32.mxu0 %v576
    %v578 = vand.u32 %v45, 4294901760
    %v579 = vsub.f32 %v45, %v578
    %580 = vmatmul.mubr.f32.gmra.mrb[0].mxu0 %v579
    %v581 = vpop.f32.mrb[0].mxu0
    %v582 = vadd.f32 %v437, %v581
    %v583 = vpop.f32.mrb[0].mxu0
    %v584 = vand.u32 %v48, 4294901760
    %v585 = vsub.f32 %v48, %v584
    %586 = vmatprep.mubr.f32.mxu0 %v585
    %v587 = vand.u32 %v47, 4294901760
    %v588 = vsub.f32 %v47, %v587
    %589 = vmatmul.mubr.f32.gmra.mrb[0].mxu0 %v588
    %v590 = vpop.f32.mrb[0].mxu0
    %v591 = vadd.f32 %v444, %v590
    %v592 = vpop.f32.mrb[0].mxu0
    %593 = vdwg.mxu0
    %594 = vmatprep.subr.mxu0 0.0
    %v595 = vand.u32 %v49, 4294901760
    %596 = vmatpush1.msra.mxu0 %v595
    %597 = vmatprep.subr.mxu0 0.0
    %v598 = vand.u32 %v50, 4294901760
    %599 = vmatpush1.msra.mxu0 %v598
    %600 = vmatprep.subr.mxu0 0.0
    %v601 = vand.u32 %v51, 4294901760
    %602 = vmatpush1.msra.mxu0 %v601
    %603 = vmatprep.subr.mxu0 0.0
    %v604 = vand.u32 %v52, 4294901760
    %605 = vmatpush1.msra.mxu0 %v604
    %606 = vmatprep.subr.mxu0 0.0
    %v607 = vand.u32 %v53, 4294901760
    %608 = vmatpush1.msra.mxu0 %v607
    %609 = vmatprep.subr.mxu0 0.0
    %v610 = vand.u32 %v54, 4294901760
    %611 = vmatpush1.msra.mxu0 %v610
    %612 = vmatprep.subr.mxu0 0.0
    %v613 = vand.u32 %v55, 4294901760
    %614 = vmatpush1.msra.mxu0 %v613
    %615 = vmatprep.subr.mxu0 0.0
    %v616 = vand.u32 %v56, 4294901760
    %617 = vmatpush1.msra.mxu0 %v616
    %618 = vmatprep.subr.mxu0 0.0
    %v619 = vand.u32 %v57, 4294901760
    %620 = vmatpush1.msra.mxu0 %v619
    %621 = vmatprep.subr.mxu0 0.0
    %v622 = vand.u32 %v58, 4294901760
    %623 = vmatpush1.msra.mxu0 %v622
    %624 = vmatprep.subr.mxu0 0.0
    %v625 = vand.u32 %v59, 4294901760
    %626 = vmatpush1.msra.mxu0 %v625
    %627 = vmatprep.subr.mxu0 0.0
    %v628 = vand.u32 %v60, 4294901760
    %629 = vmatpush1.msra.mxu0 %v628
    %630 = vmatprep.subr.mxu0 0.0
    %v631 = vand.u32 %v61, 4294901760
    %632 = vmatpush1.msra.mxu0 %v631
    %633 = vmatprep.subr.mxu0 0.0
    %v634 = vand.u32 %v62, 4294901760
    %635 = vmatpush1.msra.mxu0 %v634
    %636 = vmatprep.subr.mxu0 0.0
    %v637 = vand.u32 %v63, 4294901760
    %638 = vmatpush1.msra.mxu0 %v637
    %639 = vmatprep.subr.mxu0 0.0
    %v640 = vand.u32 %v64, 4294901760
    %641 = vmatpush1.msra.mxu0 %v640
    %642 = vmatprep.subr.mxu0 0.0
    %v643 = vand.u32 %v65, 4294901760
    %644 = vmatpush1.msra.mxu0 %v643
    %645 = vmatprep.subr.mxu0 0.0
    %v646 = vand.u32 %v66, 4294901760
    %647 = vmatpush1.msra.mxu0 %v646
    %648 = vmatprep.subr.mxu0 0.0
    %v649 = vand.u32 %v67, 4294901760
    %650 = vmatpush1.msra.mxu0 %v649
    %651 = vmatprep.subr.mxu0 0.0
    %v652 = vand.u32 %v68, 4294901760
    %653 = vmatpush1.msra.mxu0 %v652
    %654 = vmatprep.subr.mxu0 0.0
    %v655 = vand.u32 %v69, 4294901760
    %656 = vmatpush1.msra.mxu0 %v655
    %657 = vmatprep.subr.mxu0 0.0
    %v658 = vand.u32 %v70, 4294901760
    %659 = vmatpush1.msra.mxu0 %v658
    %660 = vmatprep.subr.mxu0 0.0
    %v661 = vand.u32 %v71, 4294901760
    %662 = vmatpush1.msra.mxu0 %v661
    %663 = vmatprep.subr.mxu0 0.0
    %v664 = vand.u32 %v72, 4294901760
    %665 = vmatpush1.msra.mxu0 %v664
    %666 = vmatprep.subr.mxu0 0.0
    %v667 = vand.u32 %v73, 4294901760
    %668 = vmatpush1.msra.mxu0 %v667
    %669 = vmatprep.subr.mxu0 0.0
    %v670 = vand.u32 %v74, 4294901760
    %671 = vmatpush1.msra.mxu0 %v670
    %672 = vmatprep.subr.mxu0 0.0
    %v673 = vand.u32 %v75, 4294901760
    %674 = vmatpush1.msra.mxu0 %v673
    %675 = vmatprep.subr.mxu0 0.0
    %v676 = vand.u32 %v76, 4294901760
    %677 = vmatpush1.msra.mxu0 %v676
    %678 = vmatprep.subr.mxu0 0.0
    %v679 = vand.u32 %v77, 4294901760
    %680 = vmatpush1.msra.mxu0 %v679
    %681 = vmatprep.subr.mxu0 0.0
    %v682 = vand.u32 %v78, 4294901760
    %683 = vmatpush1.msra.mxu0 %v682
    %684 = vmatprep.subr.mxu0 0.0
    %v685 = vand.u32 %v79, 4294901760
    %686 = vmatpush1.msra.mxu0 %v685
    %687 = vmatprep.subr.mxu0 0.0
    %v688 = vand.u32 %v80, 4294901760
    %689 = vmatpush1.msra.mxu0 %v688
    %v690 = vand.u32 %v46, 4294901760
    %v691 = vsub.f32 %v46, %v690
    %v692 = vand.u32 %v691, 4294901760
    %693 = vmatprep.mubr.f32.mxu0 %v692
    %v694 = vand.u32 %v45, 4294901760
    %v695 = vsub.f32 %v45, %v694
    %v696 = vand.u32 %v695, 4294901760
    %697 = vmatmul.mubr.f32.gmra.mrb[0].mxu0 %v696
    %v698 = vpop.f32.mrb[0].mxu0
    %v699 = vadd.f32 %v582, %v698
    %v700 = vpop.f32.mrb[0].mxu0
    %v701 = vand.u32 %v48, 4294901760
    %v702 = vsub.f32 %v48, %v701
    %v703 = vand.u32 %v702, 4294901760
    %704 = vmatprep.mubr.f32.mxu0 %v703
    %v705 = vand.u32 %v47, 4294901760
    %v706 = vsub.f32 %v47, %v705
    %v707 = vand.u32 %v706, 4294901760
    %708 = vmatmul.mubr.f32.gmra.mrb[0].mxu0 %v707
    %v709 = vpop.f32.mrb[0].mxu0
    %v710 = vadd.f32 %v591, %v709
    %v711 = vpop.f32.mrb[0].mxu0
    %712 = vdwg.mxu0
    %713 = vmatprep.subr.mxu0 0.0
    %v714 = vand.u32 %v49, 4294901760
    %v715 = vsub.f32 %v49, %v714
    %v716 = vand.u32 %v715, 4294901760
    %717 = vmatpush1.msra.mxu0 %v716
    %718 = vmatprep.subr.mxu0 0.0
    %v719 = vand.u32 %v50, 4294901760
    %v720 = vsub.f32 %v50, %v719
    %v721 = vand.u32 %v720, 4294901760
    %722 = vmatpush1.msra.mxu0 %v721
    %723 = vmatprep.subr.mxu0 0.0
    %v724 = vand.u32 %v51, 4294901760
    %v725 = vsub.f32 %v51, %v724
    %v726 = vand.u32 %v725, 4294901760
    %727 = vmatpush1.msra.mxu0 %v726
    %728 = vmatprep.subr.mxu0 0.0
    %v729 = vand.u32 %v52, 4294901760
    %v730 = vsub.f32 %v52, %v729
    %v731 = vand.u32 %v730, 4294901760
    %732 = vmatpush1.msra.mxu0 %v731
    %733 = vmatprep.subr.mxu0 0.0
    %v734 = vand.u32 %v53, 4294901760
    %v735 = vsub.f32 %v53, %v734
    %v736 = vand.u32 %v735, 4294901760
    %737 = vmatpush1.msra.mxu0 %v736
    %738 = vmatprep.subr.mxu0 0.0
    %v739 = vand.u32 %v54, 4294901760
    %v740 = vsub.f32 %v54, %v739
    %v741 = vand.u32 %v740, 4294901760
    %742 = vmatpush1.msra.mxu0 %v741
    %743 = vmatprep.subr.mxu0 0.0
    %v744 = vand.u32 %v55, 4294901760
    %v745 = vsub.f32 %v55, %v744
    %v746 = vand.u32 %v745, 4294901760
    %747 = vmatpush1.msra.mxu0 %v746
    %748 = vmatprep.subr.mxu0 0.0
    %v749 = vand.u32 %v56, 4294901760
    %v750 = vsub.f32 %v56, %v749
    %v751 = vand.u32 %v750, 4294901760
    %752 = vmatpush1.msra.mxu0 %v751
    %753 = vmatprep.subr.mxu0 0.0
    %v754 = vand.u32 %v57, 4294901760
    %v755 = vsub.f32 %v57, %v754
    %v756 = vand.u32 %v755, 4294901760
    %757 = vmatpush1.msra.mxu0 %v756
    %758 = vmatprep.subr.mxu0 0.0
    %v759 = vand.u32 %v58, 4294901760
    %v760 = vsub.f32 %v58, %v759
    %v761 = vand.u32 %v760, 4294901760
    %762 = vmatpush1.msra.mxu0 %v761
    %763 = vmatprep.subr.mxu0 0.0
    %v764 = vand.u32 %v59, 4294901760
    %v765 = vsub.f32 %v59, %v764
    %v766 = vand.u32 %v765, 4294901760
    %767 = vmatpush1.msra.mxu0 %v766
    %768 = vmatprep.subr.mxu0 0.0
    %v769 = vand.u32 %v60, 4294901760
    %v770 = vsub.f32 %v60, %v769
    %v771 = vand.u32 %v770, 4294901760
    %772 = vmatpush1.msra.mxu0 %v771
    %773 = vmatprep.subr.mxu0 0.0
    %v774 = vand.u32 %v61, 4294901760
    %v775 = vsub.f32 %v61, %v774
    %v776 = vand.u32 %v775, 4294901760
    %777 = vmatpush1.msra.mxu0 %v776
    %778 = vmatprep.subr.mxu0 0.0
    %v779 = vand.u32 %v62, 4294901760
    %v780 = vsub.f32 %v62, %v779
    %v781 = vand.u32 %v780, 4294901760
    %782 = vmatpush1.msra.mxu0 %v781
    %783 = vmatprep.subr.mxu0 0.0
    %v784 = vand.u32 %v63, 4294901760
    %v785 = vsub.f32 %v63, %v784
    %v786 = vand.u32 %v785, 4294901760
    %787 = vmatpush1.msra.mxu0 %v786
    %788 = vmatprep.subr.mxu0 0.0
    %v789 = vand.u32 %v64, 4294901760
    %v790 = vsub.f32 %v64, %v789
    %v791 = vand.u32 %v790, 4294901760
    %792 = vmatpush1.msra.mxu0 %v791
    %793 = vmatprep.subr.mxu0 0.0
    %v794 = vand.u32 %v65, 4294901760
    %v795 = vsub.f32 %v65, %v794
    %v796 = vand.u32 %v795, 4294901760
    %797 = vmatpush1.msra.mxu0 %v796
    %798 = vmatprep.subr.mxu0 0.0
    %v799 = vand.u32 %v66, 4294901760
    %v800 = vsub.f32 %v66, %v799
    %v801 = vand.u32 %v800, 4294901760
    %802 = vmatpush1.msra.mxu0 %v801
    %803 = vmatprep.subr.mxu0 0.0
    %v804 = vand.u32 %v67, 4294901760
    %v805 = vsub.f32 %v67, %v804
    %v806 = vand.u32 %v805, 4294901760
    %807 = vmatpush1.msra.mxu0 %v806
    %808 = vmatprep.subr.mxu0 0.0
    %v809 = vand.u32 %v68, 4294901760
    %v810 = vsub.f32 %v68, %v809
    %v811 = vand.u32 %v810, 4294901760
    %812 = vmatpush1.msra.mxu0 %v811
    %813 = vmatprep.subr.mxu0 0.0
    %v814 = vand.u32 %v69, 4294901760
    %v815 = vsub.f32 %v69, %v814
    %v816 = vand.u32 %v815, 4294901760
    %817 = vmatpush1.msra.mxu0 %v816
    %818 = vmatprep.subr.mxu0 0.0
    %v819 = vand.u32 %v70, 4294901760
    %v820 = vsub.f32 %v70, %v819
    %v821 = vand.u32 %v820, 4294901760
    %822 = vmatpush1.msra.mxu0 %v821
    %823 = vmatprep.subr.mxu0 0.0
    %v824 = vand.u32 %v71, 4294901760
    %v825 = vsub.f32 %v71, %v824
    %v826 = vand.u32 %v825, 4294901760
    %827 = vmatpush1.msra.mxu0 %v826
    %828 = vmatprep.subr.mxu0 0.0
    %v829 = vand.u32 %v72, 4294901760
    %v830 = vsub.f32 %v72, %v829
    %v831 = vand.u32 %v830, 4294901760
    %832 = vmatpush1.msra.mxu0 %v831
    %833 = vmatprep.subr.mxu0 0.0
    %v834 = vand.u32 %v73, 4294901760
    %v835 = vsub.f32 %v73, %v834
    %v836 = vand.u32 %v835, 4294901760
    %837 = vmatpush1.msra.mxu0 %v836
    %838 = vmatprep.subr.mxu0 0.0
    %v839 = vand.u32 %v74, 4294901760
    %v840 = vsub.f32 %v74, %v839
    %v841 = vand.u32 %v840, 4294901760
    %842 = vmatpush1.msra.mxu0 %v841
    %843 = vmatprep.subr.mxu0 0.0
    %v844 = vand.u32 %v75, 4294901760
    %v845 = vsub.f32 %v75, %v844
    %v846 = vand.u32 %v845, 4294901760
    %847 = vmatpush1.msra.mxu0 %v846
    %848 = vmatprep.subr.mxu0 0.0
    %v849 = vand.u32 %v76, 4294901760
    %v850 = vsub.f32 %v76, %v849
    %v851 = vand.u32 %v850, 4294901760
    %852 = vmatpush1.msra.mxu0 %v851
    %853 = vmatprep.subr.mxu0 0.0
    %v854 = vand.u32 %v77, 4294901760
    %v855 = vsub.f32 %v77, %v854
    %v856 = vand.u32 %v855, 4294901760
    %857 = vmatpush1.msra.mxu0 %v856
    %858 = vmatprep.subr.mxu0 0.0
    %v859 = vand.u32 %v78, 4294901760
    %v860 = vsub.f32 %v78, %v859
    %v861 = vand.u32 %v860, 4294901760
    %862 = vmatpush1.msra.mxu0 %v861
    %863 = vmatprep.subr.mxu0 0.0
    %v864 = vand.u32 %v79, 4294901760
    %v865 = vsub.f32 %v79, %v864
    %v866 = vand.u32 %v865, 4294901760
    %867 = vmatpush1.msra.mxu0 %v866
    %868 = vmatprep.subr.mxu0 0.0
    %v869 = vand.u32 %v80, 4294901760
    %v870 = vsub.f32 %v80, %v869
    %v871 = vand.u32 %v870, 4294901760
    %872 = vmatpush1.msra.mxu0 %v871
    %v873 = vand.u32 %v46, 4294901760
    %874 = vmatprep.mubr.f32.mxu0 %v873
    %v875 = vand.u32 %v45, 4294901760
    %876 = vmatmul.mubr.f32.gmra.mrb[0].mxu0 %v875
    %v877 = vpop.f32.mrb[0].mxu0
    %v878 = vadd.f32 %v699, %v877
    %v879 = vpop.f32.mrb[0].mxu0
    %v880 = vand.u32 %v48, 4294901760
    %881 = vmatprep.mubr.f32.mxu0 %v880
    %v882 = vand.u32 %v47, 4294901760
    %883 = vmatmul.mubr.f32.gmra.mrb[0].mxu0 %v882
    %v884 = vpop.f32.mrb[0].mxu0
    %v885 = vadd.f32 %v710, %v884
    %v886 = vpop.f32.mrb[0].mxu0
    %887 = vdwg.mxu0
    %888 = vmatprep.subr.mxu0 0.0
    %v889 = vand.u32 %v49, 4294901760
    %890 = vmatpush1.msra.mxu0 %v889
    %891 = vmatprep.subr.mxu0 0.0
    %v892 = vand.u32 %v50, 4294901760
    %893 = vmatpush1.msra.mxu0 %v892
    %894 = vmatprep.subr.mxu0 0.0
    %v895 = vand.u32 %v51, 4294901760
    %896 = vmatpush1.msra.mxu0 %v895
    %897 = vmatprep.subr.mxu0 0.0
    %v898 = vand.u32 %v52, 4294901760
    %899 = vmatpush1.msra.mxu0 %v898
    %900 = vmatprep.subr.mxu0 0.0
    %v901 = vand.u32 %v53, 4294901760
    %902 = vmatpush1.msra.mxu0 %v901
    %903 = vmatprep.subr.mxu0 0.0
    %v904 = vand.u32 %v54, 4294901760
    %905 = vmatpush1.msra.mxu0 %v904
    %906 = vmatprep.subr.mxu0 0.0
    %v907 = vand.u32 %v55, 4294901760
    %908 = vmatpush1.msra.mxu0 %v907
    %909 = vmatprep.subr.mxu0 0.0
    %v910 = vand.u32 %v56, 4294901760
    %911 = vmatpush1.msra.mxu0 %v910
    %912 = vmatprep.subr.mxu0 0.0
    %v913 = vand.u32 %v57, 4294901760
    %914 = vmatpush1.msra.mxu0 %v913
    %915 = vmatprep.subr.mxu0 0.0
    %v916 = vand.u32 %v58, 4294901760
    %917 = vmatpush1.msra.mxu0 %v916
    %918 = vmatprep.subr.mxu0 0.0
    %v919 = vand.u32 %v59, 4294901760
    %920 = vmatpush1.msra.mxu0 %v919
    %921 = vmatprep.subr.mxu0 0.0
    %v922 = vand.u32 %v60, 4294901760
    %923 = vmatpush1.msra.mxu0 %v922
    %924 = vmatprep.subr.mxu0 0.0
    %v925 = vand.u32 %v61, 4294901760
    %926 = vmatpush1.msra.mxu0 %v925
    %927 = vmatprep.subr.mxu0 0.0
    %v928 = vand.u32 %v62, 4294901760
    %929 = vmatpush1.msra.mxu0 %v928
    %930 = vmatprep.subr.mxu0 0.0
    %v931 = vand.u32 %v63, 4294901760
    %932 = vmatpush1.msra.mxu0 %v931
    %933 = vmatprep.subr.mxu0 0.0
    %v934 = vand.u32 %v64, 4294901760
    %935 = vmatpush1.msra.mxu0 %v934
    %936 = vmatprep.subr.mxu0 0.0
    %v937 = vand.u32 %v65, 4294901760
    %938 = vmatpush1.msra.mxu0 %v937
    %939 = vmatprep.subr.mxu0 0.0
    %v940 = vand.u32 %v66, 4294901760
    %941 = vmatpush1.msra.mxu0 %v940
    %942 = vmatprep.subr.mxu0 0.0
    %v943 = vand.u32 %v67, 4294901760
    %944 = vmatpush1.msra.mxu0 %v943
    %945 = vmatprep.subr.mxu0 0.0
    %v946 = vand.u32 %v68, 4294901760
    %947 = vmatpush1.msra.mxu0 %v946
    %948 = vmatprep.subr.mxu0 0.0
    %v949 = vand.u32 %v69, 4294901760
    %950 = vmatpush1.msra.mxu0 %v949
    %951 = vmatprep.subr.mxu0 0.0
    %v952 = vand.u32 %v70, 4294901760
    %953 = vmatpush1.msra.mxu0 %v952
    %954 = vmatprep.subr.mxu0 0.0
    %v955 = vand.u32 %v71, 4294901760
    %956 = vmatpush1.msra.mxu0 %v955
    %957 = vmatprep.subr.mxu0 0.0
    %v958 = vand.u32 %v72, 4294901760
    %959 = vmatpush1.msra.mxu0 %v958
    %960 = vmatprep.subr.mxu0 0.0
    %v961 = vand.u32 %v73, 4294901760
    %962 = vmatpush1.msra.mxu0 %v961
    %963 = vmatprep.subr.mxu0 0.0
    %v964 = vand.u32 %v74, 4294901760
    %965 = vmatpush1.msra.mxu0 %v964
    %966 = vmatprep.subr.mxu0 0.0
    %v967 = vand.u32 %v75, 4294901760
    %968 = vmatpush1.msra.mxu0 %v967
    %969 = vmatprep.subr.mxu0 0.0
    %v970 = vand.u32 %v76, 4294901760
    %971 = vmatpush1.msra.mxu0 %v970
    %972 = vmatprep.subr.mxu0 0.0
    %v973 = vand.u32 %v77, 4294901760
    %974 = vmatpush1.msra.mxu0 %v973
    %975 = vmatprep.subr.mxu0 0.0
    %v976 = vand.u32 %v78, 4294901760
    %977 = vmatpush1.msra.mxu0 %v976
    %978 = vmatprep.subr.mxu0 0.0
    %v979 = vand.u32 %v79, 4294901760
    %980 = vmatpush1.msra.mxu0 %v979
    %981 = vmatprep.subr.mxu0 0.0
    %v982 = vand.u32 %v80, 4294901760
    %983 = vmatpush1.msra.mxu0 %v982
    %v984 = vand.u32 %v46, 4294901760
    %985 = vmatprep.mubr.f32.mxu0 %v984
    %v986 = vand.u32 %v45, 4294901760
    %987 = vmatmul.mubr.f32.gmra.mrb[0].mxu0 %v986
    %v988 = vpop.f32.mrb[0].mxu0
    %v989 = vadd.f32 %v878, %v988
    %v990 = vpop.f32.mrb[0].mxu0
    %v991 = vand.u32 %v48, 4294901760
    %992 = vmatprep.mubr.f32.mxu0 %v991
    %v993 = vand.u32 %v47, 4294901760
    %994 = vmatmul.mubr.f32.gmra.mrb[0].mxu0 %v993
    %v995 = vpop.f32.mrb[0].mxu0
    %v996 = vadd.f32 %v885, %v995
    %v997 = vpop.f32.mrb[0].mxu0
    %998 = vdwg.mxu0
    %999 = vst [vmem:[#allocation5] sm:$0xff] %v989
    %1000 = vst [vmem:[#allocation5 + $0x8] sm:$0xff] %v996
    // Predicated region
    $region14: #{tpu_custom_call.1} parent=1 // pred_check
      _
    $region15: #{tpu_custom_call.1} parent=1 // pred_check_branch
      %1002 = sbr.rel (0) target = $region17
    $region16: #{tpu_custom_call.1} parent=1 // pred_region
      %s1004 = ssub.s32 256, 256
      %1005 = vsyncadd [#allocation4], %s1004
      %s1006 = sshll.u32 [#allocation5], 4
      %s1007 = int_to_ptr.vmem [resolvable:$true] %s1006
      %1012 = dma.vmem_to_hbm [thread:$0]  %s1007, 256, %s2, [#allocation4], 128, 128, 8
    $region17: #{tpu_custom_call.1} parent=1 // pred_fallthru
      _
    // Predicated region
    $region18: #{tpu_custom_call.1} parent=1 // pred_check
      _
    $region19: #{tpu_custom_call.1} parent=1 // pred_check_branch
      %1014 = sbr.rel (0) target = $region21
    $region20: #{tpu_custom_call.1} parent=1 // pred_region
      %1015 = dma.done [#allocation4], 256
    $region21: #{tpu_custom_call.1} parent=1 // pred_fallthru
      _
    %1016 = vsyncpa [#allocation3], 1
    %1017 = vsyncpa [#allocation4], 1

</llo_original>
